<compile_context>
chip_gen: v7x
topology: tpu7x:2x2x1
jax: 0.10.0
libtpu: 0.0.40
codegen_flags: <defaults>
</compile_context>

<pallas_src>
import jax
import jax.numpy as jnp
from jax.experimental import pallas as pl
from jax.experimental.pallas import tpu as pltpu


def make_basic_block_kernel(H, W):
    HW = H * W

    def kernel(x_ref, w1_ref, w2_ref, b_ref, o_ref):
        xf = x_ref[0]                                   # (Cin, H*W), lane-dense

        # w-coordinate of every flattened spatial position (computed once,
        # reused by both convs).
        w_idx = jax.lax.broadcasted_iota(jnp.int32, (1, HW), 1) % W
        wl = (w_idx >= 1).astype(jnp.float32)           # valid for dw = -1
        wr = (w_idx <= W - 2).astype(jnp.float32)       # valid for dw = +1

        def shift_zero(a, off):
            # y[:, i] = a[:, i + off] if 0 <= i + off < HW else 0
            if off == 0:
                return a
            z = jnp.zeros((a.shape[0], abs(off)), a.dtype)
            if off > 0:
                return jnp.concatenate([a[:, off:], z], axis=1)
            return jnp.concatenate([z, a[:, :off]], axis=1)

        def taps3x3(a):
            # Build the 9 shifted taps of a 3x3 conv (padding=1) and stack
            # them along the channel (sublane) axis -> (9*C, H*W).
            ts = []
            for dh in (-1, 0, 1):
                for dw in (-1, 0, 1):
                    # flat shift handles the h boundary via zero fill at the
                    # array ends; only the w wrap needs an explicit mask.
                    t = shift_zero(a, dh * W + dw)
                    if dw == -1:
                        t = t * wl
                    elif dw == 1:
                        t = t * wr
                    ts.append(t)
            return jnp.concatenate(ts, axis=0)

        # conv1 (3x3, BN folded) + bias + ReLU  -> (Cout, H*W)
        h1 = jnp.dot(w1_ref[...], taps3x3(xf),
                     preferred_element_type=jnp.float32) + b_ref[0]
        h1 = jnp.maximum(h1, 0.0)

        # conv2 (3x3, BN folded) + bias
        h2 = jnp.dot(w2_ref[...], taps3x3(h1),
                     preferred_element_type=jnp.float32) + b_ref[1]

        # identity residual + ReLU, lane-dense store
        o_ref[0] = jnp.maximum(h2 + xf, 0.0)

    return kernel


def basic_block_forward(x, w1, w2, g1, be1, m1, v1, g2, be2, m2, v2, eps=1e-5):
    """x: (N, Cin, H, W) NCHW. conv weights: (Cout, Cin, 3, 3) PyTorch layout."""
    N, Cin, H, W = x.shape
    Cout = w1.shape[0]
    assert Cin == Cout, "identity residual requires inplanes == planes"
    HW = H * W

    # Fold eval-mode BN into the conv weights; keep only per-channel shifts.
    s1 = g1 / jnp.sqrt(v1 + eps)
    t1 = be1 - m1 * s1
    s2 = g2 / jnp.sqrt(v2 + eps)
    t2 = be2 - m2 * s2
    w1f = w1 * s1[:, None, None, None]
    w2f = w2 * s2[:, None, None, None]

    # Stack the 3x3 taps into one matmul weight: (Cout, kh, kw, Cin) ->
    # (Cout, 9*Cin), matching the kernel's tap order ((dh, dw) outer, ci inner).
    w1s = jnp.transpose(w1f, (0, 2, 3, 1)).reshape(Cout, 9 * Cin)
    w2s = jnp.transpose(w2f, (0, 2, 3, 1)).reshape(Cout, 9 * Cout)
    bias = jnp.stack([t1, t2], axis=0)[:, :, None]       # (2, Cout, 1)

    xf = x.reshape(N, Cin, HW)                           # free reshape (NCHW)

    out = pl.pallas_call(
        make_basic_block_kernel(H, W),
        out_shape=jax.ShapeDtypeStruct((N, Cout, HW), jnp.float32),
        grid_spec=pltpu.PrefetchScalarGridSpec(
            num_scalar_prefetch=0,
            grid=(N,),
            in_specs=[
                pl.BlockSpec((1, Cin, HW), lambda n: (n, 0, 0)),
                pl.BlockSpec((Cout, 9 * Cin), lambda n: (0, 0)),
                pl.BlockSpec((Cout, 9 * Cout), lambda n: (0, 0)),
                pl.BlockSpec((2, Cout, 1), lambda n: (0, 0, 0)),
            ],
            out_specs=pl.BlockSpec((1, Cout, HW), lambda n: (n, 0, 0)),
        ),
        compiler_params=pltpu.CompilerParams(
            dimension_semantics=("parallel",)),
    )(xf, w1s, w2s, bias)

    return out.reshape(N, Cout, H, W)                    # free reshape back


def basic_block_ref(x, w1, w2, g1, be1, m1, v1, g2, be2, m2, v2, eps=1e-5):
    """Pure-JAX NCHW reference mirroring the PyTorch forward (eval BN)."""
    def conv3x3(y, w):
        return jax.lax.conv_general_dilated(
            y, w, window_strides=(1, 1), padding=((1, 1), (1, 1)),
            dimension_numbers=("NCHW", "OIHW", "NCHW"),
            precision=jax.lax.Precision.HIGHEST)

    def bn(y, g, b, m, v):
        s = g / jnp.sqrt(v + eps)
        return y * s[None, :, None, None] + (b - m * s)[None, :, None, None]

    out = jax.nn.relu(bn(conv3x3(x, w1), g1, be1, m1, v1))
    out = bn(conv3x3(out, w2), g2, be2, m2, v2)
    return jax.nn.relu(out + x)


if __name__ == "__main__":
    # inplanes = planes = 8 (identity residual), batch=2, spatial=16x16
    N, C, H, W = 2, 8, 16, 16

    key = jax.random.PRNGKey(0)
    ks = jax.random.split(key, 11)
    x = jax.random.normal(ks[0], (N, C, H, W), jnp.float32)

    w1 = jax.random.normal(ks[1], (C, C, 3, 3), jnp.float32) * 0.2   # conv1
    w2 = jax.random.normal(ks[2], (C, C, 3, 3), jnp.float32) * 0.2   # conv2

    # BatchNorm2d (eval) parameters
    g1 = jax.random.uniform(ks[3], (C,), jnp.float32, 0.5, 1.5)
    b1 = jax.random.normal(ks[4], (C,), jnp.float32) * 0.1
    m1 = jax.random.normal(ks[5], (C,), jnp.float32) * 0.1
    v1 = jax.random.uniform(ks[6], (C,), jnp.float32, 0.5, 1.5)
    g2 = jax.random.uniform(ks[7], (C,), jnp.float32, 0.5, 1.5)
    b2 = jax.random.normal(ks[8], (C,), jnp.float32) * 0.1
    m2 = jax.random.normal(ks[9], (C,), jnp.float32) * 0.1
    v2 = jax.random.uniform(ks[10], (C,), jnp.float32, 0.5, 1.5)

    out = basic_block_forward(x, w1, w2, g1, b1, m1, v1, g2, b2, m2, v2)
    out = jax.block_until_ready(out)

    ref = basic_block_ref(x, w1, w2, g1, b1, m1, v1, g2, b2, m2, v2)
    assert out.shape == (N, C, H, W), out.shape
    max_err = float(jnp.max(jnp.abs(out - ref)))
    assert jnp.allclose(out, ref, atol=2e-4, rtol=2e-4), max_err
    print("KERNEL_OK")
</pallas_src>

<mosaic_0001>
module attributes {stable_mosaic.version = 11 : i64} {
  func.func @kernel(%arg0: i32, %arg1: memref<1x8x256xf32, #tpu.memory_space<vmem>>, %arg2: memref<8x72xf32, #tpu.memory_space<vmem>>, %arg3: memref<8x72xf32, #tpu.memory_space<vmem>>, %arg4: memref<2x8x1xf32, #tpu.memory_space<vmem>>, %arg5: memref<1x8x256xf32, #tpu.memory_space<vmem>>) attributes {dimension_semantics = [#tpu.dimension_semantics<parallel>], iteration_bounds = array<i64: 2>, scalar_prefetch = 0 : i64, scratch_operands = 0 : i64, tpu.core_type = #tpu.core_type<tc>, window_params = [{transform_indices = @transform_0, window_bounds = array<i64: 1, 8, 256>}, {pipeline_mode = #tpu.pipeline_mode<synchronous>, transform_indices = @transform_1, window_bounds = array<i64: 8, 72>}, {pipeline_mode = #tpu.pipeline_mode<synchronous>, transform_indices = @transform_2, window_bounds = array<i64: 8, 72>}, {pipeline_mode = #tpu.pipeline_mode<synchronous>, transform_indices = @transform_3, window_bounds = array<i64: 2, 8, 1>}, {transform_indices = @transform_4, window_bounds = array<i64: 1, 8, 256>}]} {
    %c0 = arith.constant 0 : index
    %c0_0 = arith.constant 0 : index
    %c0_1 = arith.constant 0 : index
    %0 = vector.load %arg1[%c0, %c0_0, %c0_1] : memref<1x8x256xf32, #tpu.memory_space<vmem>>, vector<1x8x256xf32>
    %1 = vector.shape_cast %0 : vector<1x8x256xf32> to vector<8x256xf32>
    %2 = tpu.iota {dimensions = array<i32: 1>} : vector<1x256xi32>
    %c16_i32 = arith.constant 16 : i32
    %c0_i32 = arith.constant 0 : i32
    %3 = arith.cmpi eq, %c16_i32, %c0_i32 : i32
    %c1_i32 = arith.constant 1 : i32
    %4 = arith.select %3, %c1_i32, %c16_i32 : i32
    %5 = vector.broadcast %4 : i32 to vector<1x256xi32>
    %6 = arith.remsi %2, %5 : vector<1x256xi32>
    %c0_i32_2 = arith.constant 0 : i32
    %7 = vector.broadcast %c0_i32_2 : i32 to vector<1x256xi32>
    %8 = arith.cmpi ne, %6, %7 : vector<1x256xi32>
    %c0_i32_3 = arith.constant 0 : i32
    %9 = vector.broadcast %c0_i32_3 : i32 to vector<1x256xi32>
    %10 = arith.cmpi slt, %6, %9 : vector<1x256xi32>
    %c0_i32_4 = arith.constant 0 : i32
    %11 = arith.cmpi slt, %4, %c0_i32_4 : i32
    %12 = vector.broadcast %11 : i1 to vector<1x256xi1>
    %13 = vector.broadcast %12 : vector<1x256xi1> to vector<1x256xi1>
    %14 = arith.xori %10, %13 : vector<1x256xi1>
    %15 = arith.andi %14, %8 : vector<1x256xi1>
    %16 = vector.broadcast %4 : i32 to vector<1x256xi32>
    %17 = arith.addi %6, %16 : vector<1x256xi32>
    %18 = arith.select %15, %17, %6 : vector<1x256xi1>, vector<1x256xi32>
    %c1_i32_5 = arith.constant 1 : i32
    %19 = vector.broadcast %c1_i32_5 : i32 to vector<1x256xi32>
    %20 = arith.cmpi sge, %18, %19 : vector<1x256xi32>
    %21 = arith.extui %20 : vector<1x256xi1> to vector<1x256xi32>
    %22 = arith.sitofp %21 : vector<1x256xi32> to vector<1x256xf32>
    %c14_i32 = arith.constant 14 : i32
    %23 = vector.broadcast %c14_i32 : i32 to vector<1x256xi32>
    %24 = arith.cmpi sle, %18, %23 : vector<1x256xi32>
    %25 = arith.extui %24 : vector<1x256xi1> to vector<1x256xi32>
    %26 = arith.sitofp %25 : vector<1x256xi32> to vector<1x256xf32>
    %c0_6 = arith.constant 0 : index
    %c0_7 = arith.constant 0 : index
    %27 = vector.load %arg2[%c0_6, %c0_7] : memref<8x72xf32, #tpu.memory_space<vmem>>, vector<8x72xf32>
    %cst = arith.constant 0.000000e+00 : f32
    %28 = vector.broadcast %cst : f32 to vector<8x17xf32>
    %29 = vector.extract_strided_slice %1 {offsets = [0, 0], sizes = [8, 239], strides = [1, 1]} : vector<8x256xf32> to vector<8x239xf32>
    %30 = tpu.concatenate %28, %29 in 1 : vector<8x17xf32>, vector<8x239xf32> -> vector<8x256xf32>
    %31 = vector.broadcast %22 : vector<1x256xf32> to vector<8x256xf32>
    %32 = arith.mulf %30, %31 : vector<8x256xf32>
    %cst_8 = arith.constant 0.000000e+00 : f32
    %33 = vector.broadcast %cst_8 : f32 to vector<8x16xf32>
    %34 = vector.extract_strided_slice %1 {offsets = [0, 0], sizes = [8, 240], strides = [1, 1]} : vector<8x256xf32> to vector<8x240xf32>
    %35 = tpu.concatenate %33, %34 in 1 : vector<8x16xf32>, vector<8x240xf32> -> vector<8x256xf32>
    %cst_9 = arith.constant 0.000000e+00 : f32
    %36 = vector.broadcast %cst_9 : f32 to vector<8x15xf32>
    %37 = vector.extract_strided_slice %1 {offsets = [0, 0], sizes = [8, 241], strides = [1, 1]} : vector<8x256xf32> to vector<8x241xf32>
    %38 = tpu.concatenate %36, %37 in 1 : vector<8x15xf32>, vector<8x241xf32> -> vector<8x256xf32>
    %39 = vector.broadcast %26 : vector<1x256xf32> to vector<8x256xf32>
    %40 = arith.mulf %38, %39 : vector<8x256xf32>
    %cst_10 = arith.constant 0.000000e+00 : f32
    %41 = vector.broadcast %cst_10 : f32 to vector<8x1xf32>
    %42 = vector.extract_strided_slice %1 {offsets = [0, 0], sizes = [8, 255], strides = [1, 1]} : vector<8x256xf32> to vector<8x255xf32>
    %43 = tpu.concatenate %41, %42 in 1 : vector<8x1xf32>, vector<8x255xf32> -> vector<8x256xf32>
    %44 = vector.broadcast %22 : vector<1x256xf32> to vector<8x256xf32>
    %45 = arith.mulf %43, %44 : vector<8x256xf32>
    %cst_11 = arith.constant 0.000000e+00 : f32
    %46 = vector.broadcast %cst_11 : f32 to vector<8x1xf32>
    %47 = vector.extract_strided_slice %1 {offsets = [0, 1], sizes = [8, 255], strides = [1, 1]} : vector<8x256xf32> to vector<8x255xf32>
    %48 = tpu.concatenate %47, %46 in 1 : vector<8x255xf32>, vector<8x1xf32> -> vector<8x256xf32>
    %49 = vector.broadcast %26 : vector<1x256xf32> to vector<8x256xf32>
    %50 = arith.mulf %48, %49 : vector<8x256xf32>
    %cst_12 = arith.constant 0.000000e+00 : f32
    %51 = vector.broadcast %cst_12 : f32 to vector<8x15xf32>
    %52 = vector.extract_strided_slice %1 {offsets = [0, 15], sizes = [8, 241], strides = [1, 1]} : vector<8x256xf32> to vector<8x241xf32>
    %53 = tpu.concatenate %52, %51 in 1 : vector<8x241xf32>, vector<8x15xf32> -> vector<8x256xf32>
    %54 = vector.broadcast %22 : vector<1x256xf32> to vector<8x256xf32>
    %55 = arith.mulf %53, %54 : vector<8x256xf32>
    %cst_13 = arith.constant 0.000000e+00 : f32
    %56 = vector.broadcast %cst_13 : f32 to vector<8x16xf32>
    %57 = vector.extract_strided_slice %1 {offsets = [0, 16], sizes = [8, 240], strides = [1, 1]} : vector<8x256xf32> to vector<8x240xf32>
    %58 = tpu.concatenate %57, %56 in 1 : vector<8x240xf32>, vector<8x16xf32> -> vector<8x256xf32>
    %cst_14 = arith.constant 0.000000e+00 : f32
    %59 = vector.broadcast %cst_14 : f32 to vector<8x17xf32>
    %60 = vector.extract_strided_slice %1 {offsets = [0, 17], sizes = [8, 239], strides = [1, 1]} : vector<8x256xf32> to vector<8x239xf32>
    %61 = tpu.concatenate %60, %59 in 1 : vector<8x239xf32>, vector<8x17xf32> -> vector<8x256xf32>
    %62 = vector.broadcast %26 : vector<1x256xf32> to vector<8x256xf32>
    %63 = arith.mulf %61, %62 : vector<8x256xf32>
    %64 = tpu.concatenate %32, %35, %40, %45, %1, %50, %55, %58, %63 in 0 : vector<8x256xf32>, vector<8x256xf32>, vector<8x256xf32>, vector<8x256xf32>, vector<8x256xf32>, vector<8x256xf32>, vector<8x256xf32>, vector<8x256xf32>, vector<8x256xf32> -> vector<72x256xf32>
    %cst_15 = arith.constant dense<0.000000e+00> : vector<8x256xf32>
    %65 = tpu.matmul %27, %64, %cst_15 {dimension_numbers = #tpu.dot_dimension_numbers<[1], [0], [0], [1], [0, 0, 1, 1], [], []>} : vector<8x72xf32>, vector<72x256xf32>, vector<8x256xf32> -> vector<8x256xf32>
    %c0_16 = arith.constant 0 : index
    %c0_17 = arith.constant 0 : index
    %c0_18 = arith.constant 0 : index
    %66 = vector.load %arg4[%c0_16, %c0_17, %c0_18] : memref<2x8x1xf32, #tpu.memory_space<vmem>>, vector<1x8x1xf32>
    %67 = vector.shape_cast %66 : vector<1x8x1xf32> to vector<8x1xf32>
    %68 = vector.broadcast %67 : vector<8x1xf32> to vector<8x256xf32>
    %69 = arith.addf %65, %68 : vector<8x256xf32>
    %cst_19 = arith.constant 0.000000e+00 : f32
    %70 = vector.broadcast %cst_19 : f32 to vector<8x256xf32>
    %71 = arith.maximumf %69, %70 : vector<8x256xf32>
    %c0_20 = arith.constant 0 : index
    %c0_21 = arith.constant 0 : index
    %72 = vector.load %arg3[%c0_20, %c0_21] : memref<8x72xf32, #tpu.memory_space<vmem>>, vector<8x72xf32>
    %cst_22 = arith.constant 0.000000e+00 : f32
    %73 = vector.broadcast %cst_22 : f32 to vector<8x17xf32>
    %74 = vector.extract_strided_slice %71 {offsets = [0, 0], sizes = [8, 239], strides = [1, 1]} : vector<8x256xf32> to vector<8x239xf32>
    %75 = tpu.concatenate %73, %74 in 1 : vector<8x17xf32>, vector<8x239xf32> -> vector<8x256xf32>
    %76 = vector.broadcast %22 : vector<1x256xf32> to vector<8x256xf32>
    %77 = arith.mulf %75, %76 : vector<8x256xf32>
    %cst_23 = arith.constant 0.000000e+00 : f32
    %78 = vector.broadcast %cst_23 : f32 to vector<8x16xf32>
    %79 = vector.extract_strided_slice %71 {offsets = [0, 0], sizes = [8, 240], strides = [1, 1]} : vector<8x256xf32> to vector<8x240xf32>
    %80 = tpu.concatenate %78, %79 in 1 : vector<8x16xf32>, vector<8x240xf32> -> vector<8x256xf32>
    %cst_24 = arith.constant 0.000000e+00 : f32
    %81 = vector.broadcast %cst_24 : f32 to vector<8x15xf32>
    %82 = vector.extract_strided_slice %71 {offsets = [0, 0], sizes = [8, 241], strides = [1, 1]} : vector<8x256xf32> to vector<8x241xf32>
    %83 = tpu.concatenate %81, %82 in 1 : vector<8x15xf32>, vector<8x241xf32> -> vector<8x256xf32>
    %84 = vector.broadcast %26 : vector<1x256xf32> to vector<8x256xf32>
    %85 = arith.mulf %83, %84 : vector<8x256xf32>
    %cst_25 = arith.constant 0.000000e+00 : f32
    %86 = vector.broadcast %cst_25 : f32 to vector<8x1xf32>
    %87 = vector.extract_strided_slice %71 {offsets = [0, 0], sizes = [8, 255], strides = [1, 1]} : vector<8x256xf32> to vector<8x255xf32>
    %88 = tpu.concatenate %86, %87 in 1 : vector<8x1xf32>, vector<8x255xf32> -> vector<8x256xf32>
    %89 = vector.broadcast %22 : vector<1x256xf32> to vector<8x256xf32>
    %90 = arith.mulf %88, %89 : vector<8x256xf32>
    %cst_26 = arith.constant 0.000000e+00 : f32
    %91 = vector.broadcast %cst_26 : f32 to vector<8x1xf32>
    %92 = vector.extract_strided_slice %71 {offsets = [0, 1], sizes = [8, 255], strides = [1, 1]} : vector<8x256xf32> to vector<8x255xf32>
    %93 = tpu.concatenate %92, %91 in 1 : vector<8x255xf32>, vector<8x1xf32> -> vector<8x256xf32>
    %94 = vector.broadcast %26 : vector<1x256xf32> to vector<8x256xf32>
    %95 = arith.mulf %93, %94 : vector<8x256xf32>
    %cst_27 = arith.constant 0.000000e+00 : f32
    %96 = vector.broadcast %cst_27 : f32 to vector<8x15xf32>
    %97 = vector.extract_strided_slice %71 {offsets = [0, 15], sizes = [8, 241], strides = [1, 1]} : vector<8x256xf32> to vector<8x241xf32>
    %98 = tpu.concatenate %97, %96 in 1 : vector<8x241xf32>, vector<8x15xf32> -> vector<8x256xf32>
    %99 = vector.broadcast %22 : vector<1x256xf32> to vector<8x256xf32>
    %100 = arith.mulf %98, %99 : vector<8x256xf32>
    %cst_28 = arith.constant 0.000000e+00 : f32
    %101 = vector.broadcast %cst_28 : f32 to vector<8x16xf32>
    %102 = vector.extract_strided_slice %71 {offsets = [0, 16], sizes = [8, 240], strides = [1, 1]} : vector<8x256xf32> to vector<8x240xf32>
    %103 = tpu.concatenate %102, %101 in 1 : vector<8x240xf32>, vector<8x16xf32> -> vector<8x256xf32>
    %cst_29 = arith.constant 0.000000e+00 : f32
    %104 = vector.broadcast %cst_29 : f32 to vector<8x17xf32>
    %105 = vector.extract_strided_slice %71 {offsets = [0, 17], sizes = [8, 239], strides = [1, 1]} : vector<8x256xf32> to vector<8x239xf32>
    %106 = tpu.concatenate %105, %104 in 1 : vector<8x239xf32>, vector<8x17xf32> -> vector<8x256xf32>
    %107 = vector.broadcast %26 : vector<1x256xf32> to vector<8x256xf32>
    %108 = arith.mulf %106, %107 : vector<8x256xf32>
    %109 = tpu.concatenate %77, %80, %85, %90, %71, %95, %100, %103, %108 in 0 : vector<8x256xf32>, vector<8x256xf32>, vector<8x256xf32>, vector<8x256xf32>, vector<8x256xf32>, vector<8x256xf32>, vector<8x256xf32>, vector<8x256xf32>, vector<8x256xf32> -> vector<72x256xf32>
    %cst_30 = arith.constant dense<0.000000e+00> : vector<8x256xf32>
    %110 = tpu.matmul %72, %109, %cst_30 {dimension_numbers = #tpu.dot_dimension_numbers<[1], [0], [0], [1], [0, 0, 1, 1], [], []>} : vector<8x72xf32>, vector<72x256xf32>, vector<8x256xf32> -> vector<8x256xf32>
    %c1 = arith.constant 1 : index
    %c0_31 = arith.constant 0 : index
    %c0_32 = arith.constant 0 : index
    %111 = vector.load %arg4[%c1, %c0_31, %c0_32] : memref<2x8x1xf32, #tpu.memory_space<vmem>>, vector<1x8x1xf32>
    %112 = vector.shape_cast %111 : vector<1x8x1xf32> to vector<8x1xf32>
    %113 = vector.broadcast %112 : vector<8x1xf32> to vector<8x256xf32>
    %114 = arith.addf %110, %113 : vector<8x256xf32>
    %115 = arith.addf %114, %1 : vector<8x256xf32>
    %cst_33 = arith.constant 0.000000e+00 : f32
    %116 = vector.broadcast %cst_33 : f32 to vector<8x256xf32>
    %117 = arith.maximumf %115, %116 : vector<8x256xf32>
    %c0_34 = arith.constant 0 : index
    %c0_35 = arith.constant 0 : index
    %c0_36 = arith.constant 0 : index
    %118 = vector.load %arg5[%c0_34, %c0_35, %c0_36] : memref<1x8x256xf32, #tpu.memory_space<vmem>>, vector<1x8x256xf32>
    %119 = vector.shape_cast %118 : vector<1x8x256xf32> to vector<8x256xf32>
    %120 = vector.shape_cast %117 : vector<8x256xf32> to vector<1x8x256xf32>
    tpu.vector_store %arg5[%c0_34, %c0_35, %c0_36], %120 {strides = array<i32>} : memref<1x8x256xf32, #tpu.memory_space<vmem>>, vector<1x8x256xf32>,
    return
  }
  func.func @transform_0(%arg0: i32) -> (i32, i32, i32) {
    %c0_i32 = arith.constant 0 : i32
    %c0_i32_0 = arith.constant 0 : i32
    %c0_i32_1 = arith.constant 0 : i32
    return %arg0, %c0_i32, %c0_i32_0 : i32, i32, i32
  }
  func.func @transform_1(%arg0: i32) -> (i32, i32) {
    %c0_i32 = arith.constant 0 : i32
    %c0_i32_0 = arith.constant 0 : i32
    %c0_i32_1 = arith.constant 0 : i32
    return %c0_i32, %c0_i32_0 : i32, i32
  }
  func.func @transform_2(%arg0: i32) -> (i32, i32) {
    %c0_i32 = arith.constant 0 : i32
    %c0_i32_0 = arith.constant 0 : i32
    %c0_i32_1 = arith.constant 0 : i32
    return %c0_i32, %c0_i32_0 : i32, i32
  }
  func.func @transform_3(%arg0: i32) -> (i32, i32, i32) {
    %c0_i32 = arith.constant 0 : i32
    %c0_i32_0 = arith.constant 0 : i32
    %c0_i32_1 = arith.constant 0 : i32
    %c0_i32_2 = arith.constant 0 : i32
    return %c0_i32, %c0_i32_0, %c0_i32_1 : i32, i32, i32
  }
  func.func @transform_4(%arg0: i32) -> (i32, i32, i32) {
    %c0_i32 = arith.constant 0 : i32
    %c0_i32_0 = arith.constant 0 : i32
    %c0_i32_1 = arith.constant 0 : i32
    return %arg0, %c0_i32, %c0_i32_0 : i32, i32, i32
  }
}

</mosaic_0001>

<llo_original>
// kernel: tpu_custom_call.1
$region0: #{tpu_custom_call.1}
  #allocation0 [shape = 'u32[]', space=smem, size = 0x4, offset = 0x4, fixed_abs, tag = 'smem constant byte address 0x4 - core index']
  #allocation1 [shape = 'u32[144,128]{1,0:T(1,128)}', space=vmem, size = 0x12000, scoped, tag = 'internal scratch']
  %s0 = inlined_call_operand.hbm [shape: f32[2,8,256], index: 0, kind: input, shape index: {}]
  %s1 = inlined_call_operand.vmem [shape: f32[8,72], index: 1, kind: input, shape index: {}]
  %s2 = inlined_call_operand.vmem [shape: f32[8,72], index: 2, kind: input, shape index: {}]
  %s3 = inlined_call_operand.vmem [shape: f32[2,8,1], index: 3, kind: input, shape index: {}]
  %s4 = inlined_call_operand.hbm [shape: f32[2,8,256], index: 4, kind: output, shape index: {}]
  %s5 = sld [smem:[#allocation0]]
  $region53: #{tpu_custom_call.1} parent=0
    _
  %s7 = ssub.s32 1, %s5
  %s8 = scalar_select 0, %s7, %s5
  $region1: #{tpu_custom_call.1} parent=0
    #allocation2 [shape = 'u8[16384]{0}', space=vmem, size = 0x4000, scoped, tag = 'input window, operand 0']
    #allocation3 [shape = 's32[2]{0}', space=sflag, size = 0x8, scoped, tag = 'scoped memory for tpu_custom_call.1']
    #allocation4 [shape = 's32[2]{0}', space=sflag, size = 0x8, scoped, tag = 'scoped memory for tpu_custom_call.1']
    #allocation5 [shape = 'u8[16384]{0}', space=vmem, size = 0x4000, scoped, tag = 'output window, operand 0']
    %9 = vsyncpa [#allocation3], 0
    %s10 = scalar_lea.sflag [#allocation3], 1
    %11 = vsyncpa %s10, 0
    %12 = vsyncpa [#allocation4], 0
    %s13 = scalar_lea.sflag [#allocation4], 1
    %14 = vsyncpa %s13, 0
    loop: start=0, step=1, limit=4
    $region2: #{tpu_custom_call.1} parent=1 // loop_pre_header
      _
    $region3: #{tpu_custom_call.1} parent=1 // loop_header
      %s16 = sphi 0, %s20
      %p17 = scmp.ge.s32.totalorder %s16, 4
      %s26 = sphi 0, %s28
      %s29 = sphi 0, %s26
      %s30 = sphi 0, %s29
      %s46 = sphi 0, %s30
      %s50 = sphi 0, %s50
      %s52 = sphi 0, %s50
      %s53 = sphi 0, %s52
      %s67 = sphi 0, %s53
      %s71 = sphi 0, %s71
      %s73 = sphi 0, %s71
      %s74 = sphi 0, %s73
      %s88 = sphi 0, %s74
      %s92 = sphi 0, %s92
      %s94 = sphi 0, %s92
      %s95 = sphi 0, %s94
      %s109 = sphi 0, %s95
      %s115 = sphi 0, %s117
      %s118 = sphi 0, %s115
      %s119 = sphi 0, %s118
      %s135 = sphi 0, %s119
    $region4: #{tpu_custom_call.1} parent=1 // loop_header_branch
      %19 = sbr.rel (%p17) target = $region8
    $region5: #{tpu_custom_call.1} parent=1 // loop_body
      %s21 = ssub.s32 %s16, 1
      %s22 = ssub.s32 %s16, 2
      %s23 = sadd.s32 %s16, 1
      %s24 = ssub.s32 %s16, %s23
      %p25 = scmp.eq.s32.totalorder %s24, 0
      %s27 = sadd.s32 %s26, 1
      %s28 = scalar_select %p25, %s26, %s27
      %p31 = pneg %p25
      %p32 = scmp.eq.s32.totalorder %s16, 1
      %p33 = por %p31, %p32
      %p34 = scmp.ne.s32.totalorder %s26, %s29
      %p35 = scmp.eq.s32.totalorder %s16, 0
      %p36 = por %p34, %p35
      %p37 = scmp.ne.s32.totalorder %s26, %s29
      %p38 = scmp.eq.s32.totalorder %s21, 1
      %p39 = por %p37, %p38
      %p40 = scmp.ne.s32.totalorder %s29, %s30
      %p41 = scmp.eq.s32.totalorder %s21, 0
      %p42 = por %p40, %p41
      %p43 = scmp.ne.s32.totalorder %s29, %s30
      %p44 = scmp.eq.s32.totalorder %s22, 1
      %p45 = por %p43, %p44
      %p47 = scmp.ne.s32.totalorder %s30, %s46
      %p48 = scmp.eq.s32.totalorder %s22, 0
      %p49 = por %p47, %p48
      %s51 = sadd.s32 %s50, 1
      %p54 = scmp.eq.s32.totalorder %s16, 1
      %p55 = scmp.ne.s32.totalorder %s50, %s52
      %p56 = scmp.eq.s32.totalorder %s16, 0
      %p57 = por %p55, %p56
      %p58 = scmp.ne.s32.totalorder %s50, %s52
      %p59 = scmp.eq.s32.totalorder %s21, 1
      %p60 = por %p58, %p59
      %p61 = scmp.ne.s32.totalorder %s52, %s53
      %p62 = scmp.eq.s32.totalorder %s21, 0
      %p63 = por %p61, %p62
      %p64 = scmp.ne.s32.totalorder %s52, %s53
      %p65 = scmp.eq.s32.totalorder %s22, 1
      %p66 = por %p64, %p65
      %p68 = scmp.ne.s32.totalorder %s53, %s67
      %p69 = scmp.eq.s32.totalorder %s22, 0
      %p70 = por %p68, %p69
      %s72 = sadd.s32 %s71, 1
      %p75 = scmp.eq.s32.totalorder %s16, 1
      %p76 = scmp.ne.s32.totalorder %s71, %s73
      %p77 = scmp.eq.s32.totalorder %s16, 0
      %p78 = por %p76, %p77
      %p79 = scmp.ne.s32.totalorder %s71, %s73
      %p80 = scmp.eq.s32.totalorder %s21, 1
      %p81 = por %p79, %p80
      %p82 = scmp.ne.s32.totalorder %s73, %s74
      %p83 = scmp.eq.s32.totalorder %s21, 0
      %p84 = por %p82, %p83
      %p85 = scmp.ne.s32.totalorder %s73, %s74
      %p86 = scmp.eq.s32.totalorder %s22, 1
      %p87 = por %p85, %p86
      %p89 = scmp.ne.s32.totalorder %s74, %s88
      %p90 = scmp.eq.s32.totalorder %s22, 0
      %p91 = por %p89, %p90
      %s93 = sadd.s32 %s92, 1
      %p96 = scmp.eq.s32.totalorder %s16, 1
      %p97 = scmp.ne.s32.totalorder %s92, %s94
      %p98 = scmp.eq.s32.totalorder %s16, 0
      %p99 = por %p97, %p98
      %p100 = scmp.ne.s32.totalorder %s92, %s94
      %p101 = scmp.eq.s32.totalorder %s21, 1
      %p102 = por %p100, %p101
      %p103 = scmp.ne.s32.totalorder %s94, %s95
      %p104 = scmp.eq.s32.totalorder %s21, 0
      %p105 = por %p103, %p104
      %p106 = scmp.ne.s32.totalorder %s94, %s95
      %p107 = scmp.eq.s32.totalorder %s22, 1
      %p108 = por %p106, %p107
      %p110 = scmp.ne.s32.totalorder %s95, %s109
      %p111 = scmp.eq.s32.totalorder %s22, 0
      %p112 = por %p110, %p111
      %s113 = ssub.s32 %s16, %s23
      %p114 = scmp.eq.s32.totalorder %s113, 0
      %s116 = sadd.s32 %s115, 1
      %s117 = scalar_select %p114, %s115, %s116
      %p120 = pneg %p114
      %p121 = scmp.eq.s32.totalorder %s16, 1
      %p122 = por %p120, %p121
      %p123 = scmp.ne.s32.totalorder %s115, %s118
      %p124 = scmp.eq.s32.totalorder %s16, 0
      %p125 = por %p123, %p124
      %p126 = scmp.ne.s32.totalorder %s115, %s118
      %p127 = scmp.eq.s32.totalorder %s21, 1
      %p128 = por %p126, %p127
      %p129 = scmp.ne.s32.totalorder %s118, %s119
      %p130 = scmp.eq.s32.totalorder %s21, 0
      %p131 = por %p129, %p130
      %p132 = scmp.ne.s32.totalorder %s118, %s119
      %p133 = scmp.eq.s32.totalorder %s22, 1
      %p134 = por %p132, %p133
      %p136 = scmp.ne.s32.totalorder %s119, %s135
      %p137 = scmp.eq.s32.totalorder %s22, 0
      %p138 = por %p136, %p137
      %p139 = scmp.le.s32.totalorder 1, %s16
      %p140 = scmp.lt.s32.totalorder %s16, 3
      %p141 = pnand %p139, %p140
      %p142 = pneg %p141
      // Predicated region
      $region9: #{tpu_custom_call.1} parent=5 // pred_check
        _
      $region10: #{tpu_custom_call.1} parent=5 // pred_check_branch
        %144 = sbr.rel (%p141) target = $region12
      $region11: #{tpu_custom_call.1} parent=5 // pred_region
        %s145 = ssub.s32 %s16, 1
        // Predicated region
        $region13: #{tpu_custom_call.1} parent=11 // pred_check
          %p146 = pneg %p63
        $region14: #{tpu_custom_call.1} parent=11 // pred_check_branch
          %148 = sbr.rel (%p146) target = $region16
        $region15: #{tpu_custom_call.1} parent=11 // pred_region
          _
        $region16: #{tpu_custom_call.1} parent=11 // pred_fallthru
          _
        // Predicated region
        $region17: #{tpu_custom_call.1} parent=11 // pred_check
          %p149 = pneg %p84
        $region18: #{tpu_custom_call.1} parent=11 // pred_check_branch
          %151 = sbr.rel (%p149) target = $region20
        $region19: #{tpu_custom_call.1} parent=11 // pred_region
          _
        $region20: #{tpu_custom_call.1} parent=11 // pred_fallthru
          _
        // Predicated region
        $region21: #{tpu_custom_call.1} parent=11 // pred_check
          %p152 = pneg %p105
        $region22: #{tpu_custom_call.1} parent=11 // pred_check_branch
          %154 = sbr.rel (%p152) target = $region24
        $region23: #{tpu_custom_call.1} parent=11 // pred_region
          _
        $region24: #{tpu_custom_call.1} parent=11 // pred_fallthru
          _
      $region12: #{tpu_custom_call.1} parent=5 // pred_fallthru
        _
      %p155 = scmp.lt.s32.totalorder %s16, 2
      // Predicated region
      $region25: #{tpu_custom_call.1} parent=5 // pred_check
        %p156 = pneg %p155
      $region26: #{tpu_custom_call.1} parent=5 // pred_check_branch
        %158 = sbr.rel (%p156) target = $region28
      $region27: #{tpu_custom_call.1} parent=5 // pred_region
        // Predicated region
        $region29: #{tpu_custom_call.1} parent=27 // pred_check
          %p159 = pneg %p36
        $region30: #{tpu_custom_call.1} parent=27 // pred_check_branch
          %161 = sbr.rel (%p159) target = $region32
        $region31: #{tpu_custom_call.1} parent=27 // pred_region
          %s162 = sand.u32 %s26, 1
          %s163 = scalar_lea.sflag [#allocation3], %s162
          %s164 = sand.u32 %s26, 1
          %s165 = smul.addr %s164, 16
          %s166 = scalar_lea.vmem [#allocation2], %s165
          %s168 = ssub.s32 256, 256
          %169 = vsyncadd %s163, %s168
          %s170 = smul.addr %s16, 2
          %s171 = smul.addr %s170, 128
          %s172 = scalar_lea.hbm %s0, %s171
          %s174 = sshll.u32 %s166, 4
          %s175 = int_to_ptr.vmem [resolvable:$true] %s174
          %177 = dma.hbm_to_vmem [thread:$0]  %s172, 256, %s175, %s163
        $region32: #{tpu_custom_call.1} parent=27 // pred_fallthru
          _
      $region28: #{tpu_custom_call.1} parent=5 // pred_fallthru
        _
      %p178 = scmp.le.s32.totalorder 1, %s16
      %p179 = scmp.lt.s32.totalorder %s16, 3
      %p180 = pnand %p178, %p179
      %p181 = pneg %p180
      // Predicated region
      $region33: #{tpu_custom_call.1} parent=5 // pred_check
        _
      $region34: #{tpu_custom_call.1} parent=5 // pred_check_branch
        %183 = sbr.rel (%p180) target = $region36
      $region35: #{tpu_custom_call.1} parent=5 // pred_region
        %s184 = ssub.s32 %s16, 1
        %s185 = sand.u32 %s29, 1
        %s186 = scalar_lea.sflag [#allocation3], %s185
        %s187 = sand.u32 %s29, 1
        %s188 = smul.addr %s187, 16
        %s189 = scalar_lea.vmem [#allocation2], %s188
        // Predicated region
        $region37: #{tpu_custom_call.1} parent=35 // pred_check
          %p190 = pneg %p42
        $region38: #{tpu_custom_call.1} parent=35 // pred_check_branch
          %192 = sbr.rel (%p190) target = $region40
        $region39: #{tpu_custom_call.1} parent=35 // pred_region
          %193 = dma.done %s186, 256
        $region40: #{tpu_custom_call.1} parent=35 // pred_fallthru
          _
        %s194 = sand.u32 %s29, 1
        %s195 = scalar_lea.sflag [#allocation3], %s194
        %s196 = sand.u32 %s29, 1
        %s197 = smul.addr %s196, 16
        %s198 = scalar_lea.vmem [#allocation2], %s197
        %p199 = pneg %p42
        %p200 = pneg %p39
        %p201 = pneg %p63
        %p202 = pneg %p60
        %p203 = pneg %p84
        %p204 = pneg %p81
        %p205 = pneg %p105
        %p206 = pneg %p102
        %p207 = pneg %p131
        %p208 = pneg %p128
        %s209 = sand.u32 %s118, 1
        %s210 = scalar_lea.sflag [#allocation4], %s209
        %s211 = sand.u32 %s118, 1
        %s212 = smul.addr %s211, 16
        %s213 = scalar_lea.vmem [#allocation5], %s212
        %v214 = vld [vmem:[%s189] sm:$0xff]
        %v215 = vld [vmem:[%s189 + $0x8] sm:$0xff]
        %v216 = vlaneseq
        %v217 = vand.u32 %v216, 127
        %v218 = vadd.s32 %v217, 128
        %vm219 = vcmp.lt.s32.totalorder %v217, 0
        %v220 = vsub.s32 0, %v217
        %v221 = vsel %vm219, %v220, %v217
        %v222 = vshrl.u32 %v221, 4
        %v223 = vand.u32 %v221, 15
        %v224 = vsub.s32 0, %v223
        %v225 = vsel %vm219, %v224, %v223
        %vm226 = vcmp.lt.s32.totalorder %v218, 0
        %v227 = vsub.s32 0, %v218
        %v228 = vsel %vm226, %v227, %v218
        %v229 = vshrl.u32 %v228, 4
        %v230 = vand.u32 %v228, 15
        %v231 = vsub.s32 0, %v230
        %v232 = vsel %vm226, %v231, %v230
        %vm233 = vcmp.ne.s32.totalorder %v225, 0
        %vm234 = vcmp.ne.s32.totalorder %v232, 0
        %vm235 = vcmp.lt.s32.totalorder %v225, 0
        %vm236 = vcmp.lt.s32.totalorder %v232, 0
        %vm237 = vmand %vm235, %vm233
        %vm238 = vmand %vm236, %vm234
        %v239 = vadd.s32 %v225, 16
        %v240 = vadd.s32 %v232, 16
        %v241 = vsel %vm237, %v239, %v225
        %v242 = vsel %vm238, %v240, %v232
        %vm243 = vcmp.ge.s32.totalorder %v241, 1
        %vm244 = vcmp.ge.s32.totalorder %v242, 1
        %v245 = vsel %vm243, 1, 0
        %v246 = vsel %vm244, 1, 0
        %v247 = vcvt.s32.f32 %v245
        %v248 = vcvt.s32.f32 %v246
        %vm249 = vcmp.le.s32.totalorder %v241, 14
        %vm250 = vcmp.le.s32.totalorder %v242, 14
        %v251 = vsel %vm249, 1, 0
        %v252 = vsel %vm250, 1, 0
        %v253 = vcvt.s32.f32 %v251
        %v254 = vcvt.s32.f32 %v252
        %v255 = vld [vmem:[%s1] sm:$0xff]
        %258 = vrot.lane.b32.xlu0 %v214, 17
        %v259 = vpop.permute.xlu0 %258
        %260 = vrot.lane.b32.xlu0 %v215, 17
        %v261 = vpop.permute.xlu0 %260
        %vm262 = vcmask 138240
        %v263 = vsel %vm262, %v259, %v261
        %v266 = vsel %vm262, 0.0, %v259
        %v267 = vmul.f32 %v266, %v247
        %v268 = vmul.f32 %v263, %v248
        %269 = vrot.lane.b32.xlu0 %v214, 16
        %v270 = vpop.permute.xlu0 %269
        %271 = vrot.lane.b32.xlu0 %v215, 16
        %v272 = vpop.permute.xlu0 %271
        %vm273 = vcmask 130048
        %v274 = vsel %vm273, %v270, %v272
        %v277 = vsel %vm273, 0.0, %v270
        %278 = vrot.lane.b32.xlu0 %v214, 15
        %v279 = vpop.permute.xlu0 %278
        %280 = vrot.lane.b32.xlu0 %v215, 15
        %v281 = vpop.permute.xlu0 %280
        %vm282 = vcmask 121856
        %v283 = vsel %vm282, %v279, %v281
        %v286 = vsel %vm282, 0.0, %v279
        %v287 = vmul.f32 %v286, %v253
        %v288 = vmul.f32 %v283, %v254
        %289 = vrot.lane.b32.xlu0 %v214, 1
        %v290 = vpop.permute.xlu0 %289
        %291 = vrot.lane.b32.xlu0 %v215, 1
        %v292 = vpop.permute.xlu0 %291
        %vm293 = vcmask 7168
        %v294 = vsel %vm293, %v290, %v292
        %v297 = vsel %vm293, 0.0, %v290
        %v298 = vmul.f32 %v297, %v247
        %v299 = vmul.f32 %v294, %v248
        %300 = vrot.lane.b32.xlu0 %v214, 127
        %v301 = vpop.permute.xlu0 %300
        %302 = vrot.lane.b32.xlu0 %v215, 127
        %v303 = vpop.permute.xlu0 %302
        %vm304 = vcmask 1039360
        %v305 = vsel %vm304, %v301, %v303
        %v308 = vsel %vm304, %v303, 0.0
        %v309 = vmul.f32 %v305, %v253
        %v310 = vmul.f32 %v308, %v254
        %311 = vrot.lane.b32.xlu0 %v214, 113
        %v312 = vpop.permute.xlu0 %311
        %313 = vrot.lane.b32.xlu0 %v215, 113
        %v314 = vpop.permute.xlu0 %313
        %vm315 = vcmask 924672
        %v316 = vsel %vm315, %v312, %v314
        %v319 = vsel %vm315, %v314, 0.0
        %v320 = vmul.f32 %v316, %v247
        %v321 = vmul.f32 %v319, %v248
        %322 = vrot.lane.b32.xlu0 %v214, 112
        %v323 = vpop.permute.xlu0 %322
        %324 = vrot.lane.b32.xlu0 %v215, 112
        %v325 = vpop.permute.xlu0 %324
        %vm326 = vcmask 916480
        %v327 = vsel %vm326, %v323, %v325
        %v330 = vsel %vm326, %v325, 0.0
        %331 = vrot.lane.b32.xlu0 %v214, 111
        %v332 = vpop.permute.xlu0 %331
        %333 = vrot.lane.b32.xlu0 %v215, 111
        %v334 = vpop.permute.xlu0 %333
        %vm335 = vcmask 908288
        %v336 = vsel %vm335, %v332, %v334
        %v339 = vsel %vm335, %v334, 0.0
        %v340 = vmul.f32 %v336, %v253
        %v341 = vmul.f32 %v339, %v254
        %v342 = vld [vmem:[%s3] sm:$0xff]
        %344 = vset.pattern.permute.xlu0 0
        %345 = vperm.xlu0 %344, %v342
        %v346 = vpop.permute.xlu0 %345
        %vm348 = vcmask 588800
        %v350 = vsel %vm348, %v255, 0
        %352 = vmatprep.subr.mxu0 %v268
        %353 = vmatpush1.msra.mxu0 %v267
        %354 = vmatprep.subr.mxu0 %v274
        %355 = vmatpush1.msra.mxu0 %v277
        %356 = vmatprep.subr.mxu0 %v288
        %357 = vmatpush1.msra.mxu0 %v287
        %358 = vmatprep.subr.mxu0 %v299
        %359 = vmatpush1.msra.mxu0 %v298
        %360 = vmatprep.subr.mxu0 %v215
        %361 = vmatpush1.msra.mxu0 %v214
        %362 = vmatprep.subr.mxu0 %v310
        %363 = vmatpush1.msra.mxu0 %v309
        %364 = vmatprep.subr.mxu0 %v321
        %365 = vmatpush1.msra.mxu0 %v320
        %366 = vmatprep.subr.mxu0 %v330
        %367 = vmatpush1.msra.mxu0 %v327
        %368 = vmatprep.subr.mxu0 %v341
        %369 = vmatpush1.msra.mxu0 %v340
        %370 = vmatprep.subr.mxu0 0.0
        %371 = vmatpush1.msra.mxu0 0.0
        %372 = vmatprep.subr.mxu0 0.0
        %373 = vmatpush1.msra.mxu0 0.0
        %374 = vmatprep.subr.mxu0 0.0
        %375 = vmatpush1.msra.mxu0 0.0
        %376 = vmatprep.subr.mxu0 0.0
        %377 = vmatpush1.msra.mxu0 0.0
        %378 = vmatprep.subr.mxu0 0.0
        %379 = vmatpush1.msra.mxu0 0.0
        %380 = vmatprep.subr.mxu0 0.0
        %381 = vmatpush1.msra.mxu0 0.0
        %382 = vmatprep.subr.mxu0 0.0
        %383 = vmatpush1.msra.mxu0 0.0
        %384 = vmatprep.subr.mxu0 0.0
        %385 = vmatpush1.msra.mxu0 0.0
        %386 = vmatprep.subr.mxu0 0.0
        %387 = vmatpush1.msra.mxu0 0.0
        %388 = vmatprep.subr.mxu0 0.0
        %389 = vmatpush1.msra.mxu0 0.0
        %390 = vmatprep.subr.mxu0 0.0
        %391 = vmatpush1.msra.mxu0 0.0
        %392 = vmatprep.subr.mxu0 0.0
        %393 = vmatpush1.msra.mxu0 0.0
        %394 = vmatprep.subr.mxu0 0.0
        %395 = vmatpush1.msra.mxu0 0.0
        %396 = vmatprep.subr.mxu0 0.0
        %397 = vmatpush1.msra.mxu0 0.0
        %398 = vmatprep.subr.mxu0 0.0
        %399 = vmatpush1.msra.mxu0 0.0
        %400 = vmatprep.subr.mxu0 0.0
        %401 = vmatpush1.msra.mxu0 0.0
        %402 = vmatprep.subr.mxu0 0.0
        %403 = vmatpush1.msra.mxu0 0.0
        %404 = vmatprep.subr.mxu0 0.0
        %405 = vmatpush1.msra.mxu0 0.0
        %406 = vmatprep.subr.mxu0 0.0
        %407 = vmatpush1.msra.mxu0 0.0
        %408 = vmatprep.subr.mxu0 0.0
        %409 = vmatpush1.msra.mxu0 0.0
        %410 = vmatprep.subr.mxu0 0.0
        %411 = vmatpush1.msra.mxu0 0.0
        %412 = vmatprep.subr.mxu0 0.0
        %413 = vmatpush1.msra.mxu0 0.0
        %414 = vmatprep.subr.mxu0 0.0
        %415 = vmatpush1.msra.mxu0 0.0
        %416 = vmatprep.mubr.f32.mxu0 0.0
        %417 = vmatmul.mubr.f32.gmra.mrb[0].mxu0 %v350
        %v418 = vpop.f32.mrb[0].mxu0
        %v419 = vadd.f32 %v346, %v418
        %v420 = vpop.f32.mrb[0].mxu0
        %v421 = vadd.f32 %v346, %v420
        %422 = vdwg.mxu0
        %v423 = vmax.f32 %v419, 0.0
        %v424 = vmax.f32 %v421, 0.0
        %v425 = vld [vmem:[%s2] sm:$0xff]
        %428 = vrot.lane.b32.xlu0 %v423, 17
        %v429 = vpop.permute.xlu0 %428
        %430 = vrot.lane.b32.xlu0 %v424, 17
        %v431 = vpop.permute.xlu0 %430
        %v432 = vsel %vm262, %v429, %v431
        %v435 = vsel %vm262, 0.0, %v429
        %v436 = vmul.f32 %v435, %v247
        %v437 = vmul.f32 %v432, %v248
        %438 = vrot.lane.b32.xlu0 %v423, 16
        %v439 = vpop.permute.xlu0 %438
        %440 = vrot.lane.b32.xlu0 %v424, 16
        %v441 = vpop.permute.xlu0 %440
        %v442 = vsel %vm273, %v439, %v441
        %v445 = vsel %vm273, 0.0, %v439
        %446 = vrot.lane.b32.xlu0 %v423, 15
        %v447 = vpop.permute.xlu0 %446
        %448 = vrot.lane.b32.xlu0 %v424, 15
        %v449 = vpop.permute.xlu0 %448
        %v450 = vsel %vm282, %v447, %v449
        %v453 = vsel %vm282, 0.0, %v447
        %v454 = vmul.f32 %v453, %v253
        %v455 = vmul.f32 %v450, %v254
        %456 = vrot.lane.b32.xlu0 %v423, 1
        %v457 = vpop.permute.xlu0 %456
        %458 = vrot.lane.b32.xlu0 %v424, 1
        %v459 = vpop.permute.xlu0 %458
        %v460 = vsel %vm293, %v457, %v459
        %v463 = vsel %vm293, 0.0, %v457
        %v464 = vmul.f32 %v463, %v247
        %v465 = vmul.f32 %v460, %v248
        %466 = vrot.lane.b32.xlu0 %v423, 127
        %v467 = vpop.permute.xlu0 %466
        %468 = vrot.lane.b32.xlu0 %v424, 127
        %v469 = vpop.permute.xlu0 %468
        %v470 = vsel %vm304, %v467, %v469
        %v473 = vsel %vm304, %v469, 0.0
        %v474 = vmul.f32 %v470, %v253
        %v475 = vmul.f32 %v473, %v254
        %476 = vrot.lane.b32.xlu0 %v423, 113
        %v477 = vpop.permute.xlu0 %476
        %478 = vrot.lane.b32.xlu0 %v424, 113
        %v479 = vpop.permute.xlu0 %478
        %v480 = vsel %vm315, %v477, %v479
        %v483 = vsel %vm315, %v479, 0.0
        %v484 = vmul.f32 %v480, %v247
        %v485 = vmul.f32 %v483, %v248
        %486 = vrot.lane.b32.xlu0 %v423, 112
        %v487 = vpop.permute.xlu0 %486
        %488 = vrot.lane.b32.xlu0 %v424, 112
        %v489 = vpop.permute.xlu0 %488
        %v490 = vsel %vm326, %v487, %v489
        %v493 = vsel %vm326, %v489, 0.0
        %494 = vrot.lane.b32.xlu0 %v423, 111
        %v495 = vpop.permute.xlu0 %494
        %496 = vrot.lane.b32.xlu0 %v424, 111
        %v497 = vpop.permute.xlu0 %496
        %v498 = vsel %vm335, %v495, %v497
        %v501 = vsel %vm335, %v497, 0.0
        %v502 = vmul.f32 %v498, %v253
        %v503 = vmul.f32 %v501, %v254
        %s504 = scalar_lea.vmem %s3, 8
        %v505 = vld [vmem:[%s504] sm:$0xff]
        %507 = vset.pattern.permute.xlu0 0
        %508 = vperm.xlu0 %507, %v505
        %v509 = vpop.permute.xlu0 %508
        %v512 = vsel %vm348, %v425, 0
        %514 = vmatprep.subr.mxu0 %v437
        %515 = vmatpush1.msra.mxu0 %v436
        %516 = vmatprep.subr.mxu0 %v442
        %517 = vmatpush1.msra.mxu0 %v445
        %518 = vmatprep.subr.mxu0 %v455
        %519 = vmatpush1.msra.mxu0 %v454
        %520 = vmatprep.subr.mxu0 %v465
        %521 = vmatpush1.msra.mxu0 %v464
        %522 = vmatprep.subr.mxu0 %v424
        %523 = vmatpush1.msra.mxu0 %v423
        %524 = vmatprep.subr.mxu0 %v475
        %525 = vmatpush1.msra.mxu0 %v474
        %526 = vmatprep.subr.mxu0 %v485
        %527 = vmatpush1.msra.mxu0 %v484
        %528 = vmatprep.subr.mxu0 %v493
        %529 = vmatpush1.msra.mxu0 %v490
        %530 = vmatprep.subr.mxu0 %v503
        %531 = vmatpush1.msra.mxu0 %v502
        %532 = vmatprep.subr.mxu0 0.0
        %533 = vmatpush1.msra.mxu0 0.0
        %534 = vmatprep.subr.mxu0 0.0
        %535 = vmatpush1.msra.mxu0 0.0
        %536 = vmatprep.subr.mxu0 0.0
        %537 = vmatpush1.msra.mxu0 0.0
        %538 = vmatprep.subr.mxu0 0.0
        %539 = vmatpush1.msra.mxu0 0.0
        %540 = vmatprep.subr.mxu0 0.0
        %541 = vmatpush1.msra.mxu0 0.0
        %542 = vmatprep.subr.mxu0 0.0
        %543 = vmatpush1.msra.mxu0 0.0
        %544 = vmatprep.subr.mxu0 0.0
        %545 = vmatpush1.msra.mxu0 0.0
        %546 = vmatprep.subr.mxu0 0.0
        %547 = vmatpush1.msra.mxu0 0.0
        %548 = vmatprep.subr.mxu0 0.0
        %549 = vmatpush1.msra.mxu0 0.0
        %550 = vmatprep.subr.mxu0 0.0
        %551 = vmatpush1.msra.mxu0 0.0
        %552 = vmatprep.subr.mxu0 0.0
        %553 = vmatpush1.msra.mxu0 0.0
        %554 = vmatprep.subr.mxu0 0.0
        %555 = vmatpush1.msra.mxu0 0.0
        %556 = vmatprep.subr.mxu0 0.0
        %557 = vmatpush1.msra.mxu0 0.0
        %558 = vmatprep.subr.mxu0 0.0
        %559 = vmatpush1.msra.mxu0 0.0
        %560 = vmatprep.subr.mxu0 0.0
        %561 = vmatpush1.msra.mxu0 0.0
        %562 = vmatprep.subr.mxu0 0.0
        %563 = vmatpush1.msra.mxu0 0.0
        %564 = vmatprep.subr.mxu0 0.0
        %565 = vmatpush1.msra.mxu0 0.0
        %566 = vmatprep.subr.mxu0 0.0
        %567 = vmatpush1.msra.mxu0 0.0
        %568 = vmatprep.subr.mxu0 0.0
        %569 = vmatpush1.msra.mxu0 0.0
        %570 = vmatprep.subr.mxu0 0.0
        %571 = vmatpush1.msra.mxu0 0.0
        %572 = vmatprep.subr.mxu0 0.0
        %573 = vmatpush1.msra.mxu0 0.0
        %574 = vmatprep.subr.mxu0 0.0
        %575 = vmatpush1.msra.mxu0 0.0
        %576 = vmatprep.subr.mxu0 0.0
        %577 = vmatpush1.msra.mxu0 0.0
        %578 = vmatprep.mubr.f32.mxu0 0.0
        %579 = vmatmul.mubr.f32.gmra.mrb[0].mxu0 %v512
        %v580 = vpop.f32.mrb[0].mxu0
        %v581 = vadd.f32 %v509, %v580
        %v582 = vpop.f32.mrb[0].mxu0
        %v583 = vadd.f32 %v509, %v582
        %584 = vdwg.mxu0
        %v585 = vadd.f32 %v581, %v214
        %v586 = vadd.f32 %v583, %v215
        %v587 = vmax.f32 %v585, 0.0
        %v588 = vmax.f32 %v586, 0.0
        %589 = vst [vmem:[%s213] sm:$0xff] %v587
        %590 = vst [vmem:[%s213 + $0x8] sm:$0xff] %v588
        %s591 = sand.u32 %s118, 1
        %s592 = scalar_lea.sflag [#allocation4], %s591
        %s593 = sand.u32 %s118, 1
        %s594 = smul.addr %s593, 16
        %s595 = scalar_lea.vmem [#allocation5], %s594
        // Predicated region
        $region41: #{tpu_custom_call.1} parent=35 // pred_check
          %p596 = pneg %p128
        $region42: #{tpu_custom_call.1} parent=35 // pred_check_branch
          %598 = sbr.rel (%p596) target = $region44
        $region43: #{tpu_custom_call.1} parent=35 // pred_region
          %s600 = ssub.s32 256, 256
          %601 = vsyncadd %s592, %s600
          %s602 = smul.addr %s21, 2
          %s603 = smul.addr %s602, 128
          %s604 = scalar_lea.hbm %s4, %s603
          %s606 = sshll.u32 %s595, 4
          %s607 = int_to_ptr.vmem [resolvable:$true] %s606
          %609 = dma.vmem_to_hbm [thread:$0]  %s607, 256, %s604, %s592
        $region44: #{tpu_custom_call.1} parent=35 // pred_fallthru
          _
      $region36: #{tpu_custom_call.1} parent=5 // pred_fallthru
        _
      %p610 = scmp.le.s32.totalorder 2, %s16
      // Predicated region
      $region45: #{tpu_custom_call.1} parent=5 // pred_check
        %p611 = pneg %p610
      $region46: #{tpu_custom_call.1} parent=5 // pred_check_branch
        %613 = sbr.rel (%p611) target = $region48
      $region47: #{tpu_custom_call.1} parent=5 // pred_region
        %s614 = ssub.s32 %s16, 2
        // Predicated region
        $region49: #{tpu_custom_call.1} parent=47 // pred_check
          %p615 = pneg %p134
        $region50: #{tpu_custom_call.1} parent=47 // pred_check_branch
          %617 = sbr.rel (%p615) target = $region52
        $region51: #{tpu_custom_call.1} parent=47 // pred_region
          %s618 = sand.u32 %s119, 1
          %s619 = scalar_lea.sflag [#allocation4], %s618
          %s620 = sand.u32 %s119, 1
          %s621 = smul.addr %s620, 16
          %s622 = scalar_lea.vmem [#allocation5], %s621
          %623 = dma.done %s619, 256
        $region52: #{tpu_custom_call.1} parent=47 // pred_fallthru
          _
      $region48: #{tpu_custom_call.1} parent=5 // pred_fallthru
        _
    $region6: #{tpu_custom_call.1} parent=1 // loop_footer
      %s20 = sadd.s32 1, %s16
    $region7: #{tpu_custom_call.1} parent=1 // loop_footer_branch
      %15 = sbr.rel target = $region3
    $region8: #{tpu_custom_call.1} parent=1 // loop_exit
      _
    %624 = vsyncpa [#allocation3], 1
    %s625 = scalar_lea.sflag [#allocation3], 1
    %626 = vsyncpa %s625, 1
    %627 = vsyncpa [#allocation4], 1
    %s628 = scalar_lea.sflag [#allocation4], 1
    %629 = vsyncpa %s628, 1

</llo_original>
